<compile_context>
chip_gen: v5e
topology: v5e:2x2
jax: 0.10.0
libtpu: 0.0.40
codegen_flags: <defaults>
</compile_context>

<pallas_src>
import math

import jax
import jax.numpy as jnp
from jax.experimental import pallas as pl
from jax.experimental.pallas import tpu as pltpu


def _drop_path_kernel(scale_ref, x_ref, o_ref):
    # scale_ref : (bblk, 1)    per-sample scale (0.0 or 1/keep_prob), x.dtype
    # x_ref     : (bblk, fblk) lane-dense data block
    # o_ref     : (bblk, fblk) output block
    o_ref[...] = x_ref[...] * scale_ref[...]


def _round_up(x, m):
    return (x + m - 1) // m * m


def _cdiv(a, b):
    return (a + b - 1) // b


def _choose_tiles(B, n_cols, itemsize, target_bytes=4 << 20):
    """Pick (bblk, cblk); data block is (bblk, cblk * 128).

    bblk is a multiple of 8 (or the full batch when B <= 8); cblk is in units
    of 128-lane columns. Block bytes stay near `target_bytes`, and the grid
    gets >= 2 steps whenever the tensor is big enough to split.
    """
    col_bytes = 128 * itemsize
    min_bblk = B if B <= 8 else 8
    # Feature block: as many 128-lane columns as fit the target with the
    # minimum batch block (keeps output stores lane-dense and large).
    cblk = max(1, min(n_cols, target_bytes // (min_bblk * col_bytes)))
    # Grow the batch block (in multiples of 8) while the block still fits.
    bblk = min_bblk
    if B > 8:
        while bblk + 8 <= B and (bblk + 8) * cblk * col_bytes <= target_bytes:
            bblk += 8
    # Guarantee >= 2 grid steps when possible (v7x: both TensorCores can take
    # work on the "parallel" axes; all gens: inter-step DMA/compute overlap).
    b_steps = _cdiv(B, bblk)
    f_steps = _cdiv(n_cols, cblk)
    if b_steps * f_steps == 1:
        if B > 8 and bblk >= 16:
            bblk = _round_up(bblk // 2, 8)
        elif n_cols >= 2:
            cblk = _cdiv(n_cols, 2)
    return bblk, cblk


def drop_path(x, drop_prob: float = 0.0, *, training: bool = False,
              key=None, seed: int = 0):
    """Pallas DropPath. x: (B, ...) -- any rank, per-sample mask on axis 0."""
    if drop_prob == 0.0 or not training:
        return x
    keep_prob = 1.0 - float(drop_prob)
    B = x.shape[0]
    F = math.prod(x.shape[1:])

    # Per-sample Bernoulli mask (same construction as the PyTorch reference:
    # floor(keep_prob + U[0,1)) in {0,1}), scaled by 1/keep_prob in f32 and
    # cast once to x.dtype in the wrapper.
    # TODO(synk): callers should pass a fresh `key` per layer/step; the fixed
    # default seed reproduces the same mask on every call.
    if key is None:
        key = jax.random.PRNGKey(seed)
    u = jax.random.uniform(key, (B,), dtype=jnp.float32)
    mask = jnp.floor(jnp.float32(keep_prob) + u)
    scale = (mask * jnp.float32(1.0 / keep_prob)).astype(x.dtype).reshape(B, 1)

    # Lane-dense 2D slab: (B, Fp) with Fp a multiple of 128 (pad, slice after).
    Fp = _round_up(F, 128)
    x2 = x.reshape(B, F)
    if Fp != F:
        x2 = jnp.pad(x2, ((0, 0), (0, Fp - F)))

    itemsize = jnp.dtype(x.dtype).itemsize
    n_cols = Fp // 128
    bblk, cblk = _choose_tiles(B, n_cols, itemsize)
    fblk = cblk * 128
    b_steps = _cdiv(B, bblk)
    f_steps = _cdiv(n_cols, cblk)

    out2 = pl.pallas_call(
        _drop_path_kernel,
        out_shape=jax.ShapeDtypeStruct((B, Fp), x.dtype),
        grid=(b_steps, f_steps),
        in_specs=[
            # per-sample scale: one (bblk, 1) sliver per batch block
            pl.BlockSpec((bblk, 1), lambda b, f: (b, 0)),
            # lane-dense data block
            pl.BlockSpec((bblk, fblk), lambda b, f: (b, f)),
        ],
        out_specs=pl.BlockSpec((bblk, fblk), lambda b, f: (b, f)),
        compiler_params=pltpu.CompilerParams(
            # Independent per-block work: shard across TensorCores on v7x.
            dimension_semantics=("parallel", "parallel"),
            # Headroom for double-buffered ~4 MiB in+out blocks on all gens.
            vmem_limit_bytes=48 << 20,
        ),
        cost_estimate=pl.CostEstimate(
            flops=B * Fp,
            transcendentals=0,
            bytes_accessed=(2 * B * Fp + B) * itemsize,
        ),
    )(scale, x2)

    if Fp != F:
        out2 = out2[:, :F]
    return out2.reshape(x.shape)


class DropPath:
    """Minimal JAX counterpart of the PyTorch DropPath module."""

    def __init__(self, drop_prob=None):
        self.drop_prob = 0.0 if drop_prob is None else float(drop_prob)
        self.training = True

    def __call__(self, x, *, key=None, seed: int = 0):
        return drop_path(x, self.drop_prob, training=self.training,
                         key=key, seed=seed)


if __name__ == "__main__":
    drop_prob = 0.1
    keep_prob = 1.0 - drop_prob

    # 1) ViT-token-like tensor; F = 256 is a multiple of 128 (no-pad path).
    key = jax.random.PRNGKey(0)
    B, N, D = 2, 8, 32
    x = jax.random.normal(key, (B, N, D), dtype=jnp.float32)

    mod = DropPath(drop_prob=drop_prob)
    y = jax.block_until_ready(mod(x, key=jax.random.PRNGKey(42)))
    assert y.shape == x.shape
    for b in range(B):
        zero = bool(jnp.allclose(y[b], 0.0))
        scaled = bool(jnp.allclose(y[b], x[b] / keep_prob, atol=1e-5))
        assert zero or scaled, "per-sample DropPath semantics violated"

    # 2) Odd shape: F % 128 != 0 and B > 8 (exercises padding + tail blocks).
    x_odd = jax.random.normal(jax.random.PRNGKey(1), (10, 3, 45),
                              dtype=jnp.float32)
    y_odd = jax.block_until_ready(
        drop_path(x_odd, drop_prob, training=True, key=jax.random.PRNGKey(7)))
    assert y_odd.shape == x_odd.shape
    for b in range(x_odd.shape[0]):
        zero = bool(jnp.allclose(y_odd[b], 0.0))
        scaled = bool(jnp.allclose(y_odd[b], x_odd[b] / keep_prob, atol=1e-5))
        assert zero or scaled, "per-sample DropPath semantics violated (odd)"

    # 3) Eval path: identity.
    mod.training = False
    y_eval = jax.block_until_ready(mod(x))
    assert jnp.array_equal(y_eval, x)

    print("KERNEL_OK")
</pallas_src>

<mosaic_0001>
module attributes {stable_mosaic.version = 11 : i64} {
  func.func @_drop_path_kernel(%arg0: i32, %arg1: i32, %arg2: memref<2x1xf32, #tpu.memory_space<vmem>>, %arg3: memref<2x128xf32, #tpu.memory_space<vmem>>, %arg4: memref<2x128xf32, #tpu.memory_space<vmem>>) attributes {dimension_semantics = [#tpu.dimension_semantics<parallel>, #tpu.dimension_semantics<parallel>], iteration_bounds = array<i64: 1, 2>, scalar_prefetch = 0 : i64, scratch_operands = 0 : i64, tpu.core_type = #tpu.core_type<tc>, window_params = [{transform_indices = @transform_0, window_bounds = array<i64: 2, 1>}, {transform_indices = @transform_1, window_bounds = array<i64: 2, 128>}, {transform_indices = @transform_2, window_bounds = array<i64: 2, 128>}]} {
    %c0 = arith.constant 0 : index
    %c0_0 = arith.constant 0 : index
    %0 = vector.load %arg3[%c0, %c0_0] : memref<2x128xf32, #tpu.memory_space<vmem>>, vector<2x128xf32>
    %c0_1 = arith.constant 0 : index
    %c0_2 = arith.constant 0 : index
    %1 = vector.load %arg2[%c0_1, %c0_2] : memref<2x1xf32, #tpu.memory_space<vmem>>, vector<2x1xf32>
    %2 = vector.broadcast %1 : vector<2x1xf32> to vector<2x128xf32>
    %3 = arith.mulf %0, %2 : vector<2x128xf32>
    %c0_3 = arith.constant 0 : index
    %c0_4 = arith.constant 0 : index
    %4 = vector.load %arg4[%c0_3, %c0_4] : memref<2x128xf32, #tpu.memory_space<vmem>>, vector<2x128xf32>
    tpu.vector_store %arg4[%c0_3, %c0_4], %3 {strides = array<i32>} : memref<2x128xf32, #tpu.memory_space<vmem>>, vector<2x128xf32>,
    return
  }
  func.func @transform_0(%arg0: i32, %arg1: i32) -> (i32, i32) {
    %c0_i32 = arith.constant 0 : i32
    %c0_i32_0 = arith.constant 0 : i32
    return %arg0, %c0_i32 : i32, i32
  }
  func.func @transform_1(%arg0: i32, %arg1: i32) -> (i32, i32) {
    %c0_i32 = arith.constant 0 : i32
    return %arg0, %arg1 : i32, i32
  }
  func.func @transform_2(%arg0: i32, %arg1: i32) -> (i32, i32) {
    %c0_i32 = arith.constant 0 : i32
    return %arg0, %arg1 : i32, i32
  }
}

</mosaic_0001>

<llo_original>
// kernel: tpu_custom_call.1
$region0: #{tpu_custom_call.1}
  #allocation0 [shape = 'u32[]', space=smem, size = 0x4, offset = 0x4, fixed_abs, tag = 'smem constant byte address 0x4 - core index']
  #allocation1 [shape = 'u32[72,128]{1,0:T(1,128)}', space=vmem, size = 0x9000, scoped, tag = 'internal scratch']
  %s0 = inlined_call_operand.vmem [shape: f32[2,1], index: 0, kind: input, shape index: {}]
  %s1 = inlined_call_operand.hbm [shape: f32[2,256], index: 1, kind: input, shape index: {}]
  %s2 = inlined_call_operand.hbm [shape: f32[2,256], index: 2, kind: output, shape index: {}]
  %s3 = sld [smem:[#allocation0]]
  $region45: #{tpu_custom_call.1} parent=0
    _
  %s5 = ssub.s32 1, %s3
  %s6 = scalar_select 0, %s5, %s3
  $region1: #{tpu_custom_call.1} parent=0
    #allocation2 [shape = 'u8[2048]{0}', space=vmem, size = 0x800, scoped, tag = 'input window, operand 1']
    #allocation3 [shape = 's32[2]{0}', space=sflag, size = 0x8, scoped, tag = 'scoped memory for tpu_custom_call.1']
    #allocation4 [shape = 's32[2]{0}', space=sflag, size = 0x8, scoped, tag = 'scoped memory for tpu_custom_call.1']
    #allocation5 [shape = 'u8[2048]{0}', space=vmem, size = 0x800, scoped, tag = 'output window, operand 0']
    %7 = vsyncpa [#allocation3], 0
    %s8 = scalar_lea.sflag [#allocation3], 1
    %9 = vsyncpa %s8, 0
    %10 = vsyncpa [#allocation4], 0
    %s11 = scalar_lea.sflag [#allocation4], 1
    %12 = vsyncpa %s11, 0
    loop: start=0, step=1, limit=4
    $region2: #{tpu_custom_call.1} parent=1 // loop_pre_header
      _
    $region3: #{tpu_custom_call.1} parent=1 // loop_header
      %s14 = sphi 0, %s18
      %p15 = scmp.ge.s32.totalorder %s14, 4
      %s21 = sphi 0, %s33
      %s22 = sphi 0, %s29
      %s23 = sphi 0, %s21
      %s24 = sphi 0, %s22
      %s25 = sphi 0, %s23
      %s26 = sphi 0, %s24
      %s36 = sphi 0, %s38
      %s39 = sphi 0, %s36
      %s40 = sphi 0, %s39
      %s56 = sphi 0, %s40
      %s64 = sphi 0, %s66
      %s67 = sphi 0, %s64
      %s68 = sphi 0, %s67
      %s84 = sphi 0, %s68
      %s92 = sphi 0, %s94
      %s95 = sphi 0, %s92
      %s96 = sphi 0, %s95
      %s112 = sphi 0, %s96
    $region4: #{tpu_custom_call.1} parent=1 // loop_header_branch
      %17 = sbr.rel (%p15) target = $region8
    $region5: #{tpu_custom_call.1} parent=1 // loop_body
      %s19 = ssub.s32 %s14, 1
      %s20 = ssub.s32 %s14, 2
      %s27 = sadd.s32 1, %s22
      %p28 = scmp.ge.s32.totalorder %s27, 2
      %s29 = scalar_select %p28, 0, %s27
      %s30 = sadd.s32 1, %s21
      %s31 = scalar_select %p28, %s30, %s21
      %p32 = scmp.ge.s32.totalorder %s31, 1
      %s33 = scalar_select %p32, 0, %s31
      %s34 = ssub.s32 %s21, %s33
      %p35 = scmp.eq.s32.totalorder %s34, 0
      %s37 = sadd.s32 %s36, 1
      %s38 = scalar_select %p35, %s36, %s37
      %p41 = pneg %p35
      %p42 = scmp.eq.s32.totalorder %s14, 1
      %p43 = por %p41, %p42
      %p44 = scmp.ne.s32.totalorder %s36, %s39
      %p45 = scmp.eq.s32.totalorder %s14, 0
      %p46 = por %p44, %p45
      %p47 = scmp.ne.s32.totalorder %s36, %s39
      %p48 = scmp.eq.s32.totalorder %s19, 1
      %p49 = por %p47, %p48
      %p50 = scmp.ne.s32.totalorder %s39, %s40
      %p51 = scmp.eq.s32.totalorder %s19, 0
      %p52 = por %p50, %p51
      %p53 = scmp.ne.s32.totalorder %s39, %s40
      %p54 = scmp.eq.s32.totalorder %s20, 1
      %p55 = por %p53, %p54
      %p57 = scmp.ne.s32.totalorder %s40, %s56
      %p58 = scmp.eq.s32.totalorder %s20, 0
      %p59 = por %p57, %p58
      %s60 = ssub.s32 %s21, %s33
      %s61 = ssub.s32 %s22, %s29
      %s62 = sor.u32 %s60, %s61
      %p63 = scmp.eq.s32.totalorder %s62, 0
      %s65 = sadd.s32 %s64, 1
      %s66 = scalar_select %p63, %s64, %s65
      %p69 = pneg %p63
      %p70 = scmp.eq.s32.totalorder %s14, 1
      %p71 = por %p69, %p70
      %p72 = scmp.ne.s32.totalorder %s64, %s67
      %p73 = scmp.eq.s32.totalorder %s14, 0
      %p74 = por %p72, %p73
      %p75 = scmp.ne.s32.totalorder %s64, %s67
      %p76 = scmp.eq.s32.totalorder %s19, 1
      %p77 = por %p75, %p76
      %p78 = scmp.ne.s32.totalorder %s67, %s68
      %p79 = scmp.eq.s32.totalorder %s19, 0
      %p80 = por %p78, %p79
      %p81 = scmp.ne.s32.totalorder %s67, %s68
      %p82 = scmp.eq.s32.totalorder %s20, 1
      %p83 = por %p81, %p82
      %p85 = scmp.ne.s32.totalorder %s68, %s84
      %p86 = scmp.eq.s32.totalorder %s20, 0
      %p87 = por %p85, %p86
      %s88 = ssub.s32 %s21, %s33
      %s89 = ssub.s32 %s22, %s29
      %s90 = sor.u32 %s88, %s89
      %p91 = scmp.eq.s32.totalorder %s90, 0
      %s93 = sadd.s32 %s92, 1
      %s94 = scalar_select %p91, %s92, %s93
      %p97 = pneg %p91
      %p98 = scmp.eq.s32.totalorder %s14, 1
      %p99 = por %p97, %p98
      %p100 = scmp.ne.s32.totalorder %s92, %s95
      %p101 = scmp.eq.s32.totalorder %s14, 0
      %p102 = por %p100, %p101
      %p103 = scmp.ne.s32.totalorder %s92, %s95
      %p104 = scmp.eq.s32.totalorder %s19, 1
      %p105 = por %p103, %p104
      %p106 = scmp.ne.s32.totalorder %s95, %s96
      %p107 = scmp.eq.s32.totalorder %s19, 0
      %p108 = por %p106, %p107
      %p109 = scmp.ne.s32.totalorder %s95, %s96
      %p110 = scmp.eq.s32.totalorder %s20, 1
      %p111 = por %p109, %p110
      %p113 = scmp.ne.s32.totalorder %s96, %s112
      %p114 = scmp.eq.s32.totalorder %s20, 0
      %p115 = por %p113, %p114
      %p116 = scmp.le.s32.totalorder 1, %s14
      %p117 = scmp.lt.s32.totalorder %s14, 3
      %p118 = pnand %p116, %p117
      %p119 = pneg %p118
      // Predicated region
      $region9: #{tpu_custom_call.1} parent=5 // pred_check
        _
      $region10: #{tpu_custom_call.1} parent=5 // pred_check_branch
        %121 = sbr.rel (%p118) target = $region12
      $region11: #{tpu_custom_call.1} parent=5 // pred_region
        %s122 = ssub.s32 %s14, 1
        // Predicated region
        $region13: #{tpu_custom_call.1} parent=11 // pred_check
          %p123 = pneg %p52
        $region14: #{tpu_custom_call.1} parent=11 // pred_check_branch
          %125 = sbr.rel (%p123) target = $region16
        $region15: #{tpu_custom_call.1} parent=11 // pred_region
          %p126 = scmp.lt.s32.totalorder %s23, 0
          %s127 = scalar_select %p126, %s23, 0
          %s128 = smul.addr %s127, 2
          %s129 = scalar_lea.vmem %s0, %s128
        $region16: #{tpu_custom_call.1} parent=11 // pred_fallthru
          _
      $region12: #{tpu_custom_call.1} parent=5 // pred_fallthru
        _
      %p130 = scmp.lt.s32.totalorder %s14, 2
      // Predicated region
      $region17: #{tpu_custom_call.1} parent=5 // pred_check
        %p131 = pneg %p130
      $region18: #{tpu_custom_call.1} parent=5 // pred_check_branch
        %133 = sbr.rel (%p131) target = $region20
      $region19: #{tpu_custom_call.1} parent=5 // pred_region
        // Predicated region
        $region21: #{tpu_custom_call.1} parent=19 // pred_check
          %p134 = pneg %p74
        $region22: #{tpu_custom_call.1} parent=19 // pred_check_branch
          %136 = sbr.rel (%p134) target = $region24
        $region23: #{tpu_custom_call.1} parent=19 // pred_region
          %s137 = sand.u32 %s64, 1
          %s138 = scalar_lea.sflag [#allocation3], %s137
          %s139 = sand.u32 %s64, 1
          %s140 = smul.addr %s139, 2
          %s141 = scalar_lea.vmem [#allocation2], %s140
          %143 = vsyncadd %s138, 0
          %s144 = smul.addr %s21, 2
          %s145 = sadd.s32 %s22, %s144
          %s146 = smul.addr %s145, 2
          %s147 = scalar_lea.hbm %s1, %s146
          %s149 = sshll.u32 %s147, 4
          %s150 = int_to_ptr.hbm [resolvable:$true] %s149
          %s151 = sshll.u32 %s141, 4
          %s152 = int_to_ptr.vmem [resolvable:$true] %s151
          %154 = dma.hbm_to_vmem [thread:$0]  %s150, 32, %s152, %s138
        $region24: #{tpu_custom_call.1} parent=19 // pred_fallthru
          _
      $region20: #{tpu_custom_call.1} parent=5 // pred_fallthru
        _
      %p155 = scmp.le.s32.totalorder 1, %s14
      %p156 = scmp.lt.s32.totalorder %s14, 3
      %p157 = pnand %p155, %p156
      %p158 = pneg %p157
      // Predicated region
      $region25: #{tpu_custom_call.1} parent=5 // pred_check
        _
      $region26: #{tpu_custom_call.1} parent=5 // pred_check_branch
        %160 = sbr.rel (%p157) target = $region28
      $region27: #{tpu_custom_call.1} parent=5 // pred_region
        %s161 = ssub.s32 %s14, 1
        %s162 = sand.u32 %s67, 1
        %s163 = scalar_lea.sflag [#allocation3], %s162
        %s164 = sand.u32 %s67, 1
        %s165 = smul.addr %s164, 2
        %s166 = scalar_lea.vmem [#allocation2], %s165
        // Predicated region
        $region29: #{tpu_custom_call.1} parent=27 // pred_check
          %p167 = pneg %p80
        $region30: #{tpu_custom_call.1} parent=27 // pred_check_branch
          %169 = sbr.rel (%p167) target = $region32
        $region31: #{tpu_custom_call.1} parent=27 // pred_region
          %171 = dma.done %s163, 32
        $region32: #{tpu_custom_call.1} parent=27 // pred_fallthru
          _
        %p172 = scmp.lt.s32.totalorder %s23, 0
        %s173 = scalar_select %p172, %s23, 0
        %s174 = smul.addr %s173, 2
        %s175 = scalar_lea.vmem %s0, %s174
        %p176 = pneg %p52
        %p177 = pneg %p49
        %s178 = sand.u32 %s67, 1
        %s179 = scalar_lea.sflag [#allocation3], %s178
        %s180 = sand.u32 %s67, 1
        %s181 = smul.addr %s180, 2
        %s182 = scalar_lea.vmem [#allocation2], %s181
        %p183 = pneg %p80
        %p184 = pneg %p77
        %p185 = pneg %p108
        %p186 = pneg %p105
        %s187 = sand.u32 %s95, 1
        %s188 = scalar_lea.sflag [#allocation4], %s187
        %s189 = sand.u32 %s95, 1
        %s190 = smul.addr %s189, 2
        %s191 = scalar_lea.vmem [#allocation5], %s190
        %p192 = scmp.lt.s32.totalorder %s23, 0
        %s193 = scalar_select %p192, %s23, 0
        %s194 = smul.addr %s193, 2
        %s195 = scalar_lea.vmem %s0, %s194
        %v196 = vld [vmem:[%s166] sm:$0x3]
        %v197 = vld [vmem:[%s195] sm:$0x3]
        %199 = vset.pattern.permute.xlu0 0
        %200 = vperm.xlu0 %199, %v197
        %v201 = vpop.permute.xlu0 %200
        %v203 = vmul.f32 %v196, %v201
        %204 = vst [vmem:[%s191] sm:$0x3] %v203
        %s205 = sand.u32 %s95, 1
        %s206 = scalar_lea.sflag [#allocation4], %s205
        %s207 = sand.u32 %s95, 1
        %s208 = smul.addr %s207, 2
        %s209 = scalar_lea.vmem [#allocation5], %s208
        // Predicated region
        $region33: #{tpu_custom_call.1} parent=27 // pred_check
          %p210 = pneg %p105
        $region34: #{tpu_custom_call.1} parent=27 // pred_check_branch
          %212 = sbr.rel (%p210) target = $region36
        $region35: #{tpu_custom_call.1} parent=27 // pred_region
          %214 = vsyncadd %s206, 0
          %s215 = smul.addr %s23, 2
          %s216 = sadd.s32 %s24, %s215
          %s217 = smul.addr %s216, 2
          %s218 = scalar_lea.hbm %s2, %s217
          %s220 = sshll.u32 %s209, 4
          %s221 = int_to_ptr.vmem [resolvable:$true] %s220
          %s222 = sshll.u32 %s218, 4
          %s223 = int_to_ptr.hbm [resolvable:$true] %s222
          %225 = dma.vmem_to_hbm [thread:$0]  %s221, 32, %s223, %s206
        $region36: #{tpu_custom_call.1} parent=27 // pred_fallthru
          _
      $region28: #{tpu_custom_call.1} parent=5 // pred_fallthru
        _
      %p226 = scmp.le.s32.totalorder 2, %s14
      // Predicated region
      $region37: #{tpu_custom_call.1} parent=5 // pred_check
        %p227 = pneg %p226
      $region38: #{tpu_custom_call.1} parent=5 // pred_check_branch
        %229 = sbr.rel (%p227) target = $region40
      $region39: #{tpu_custom_call.1} parent=5 // pred_region
        %s230 = ssub.s32 %s14, 2
        // Predicated region
        $region41: #{tpu_custom_call.1} parent=39 // pred_check
          %p231 = pneg %p111
        $region42: #{tpu_custom_call.1} parent=39 // pred_check_branch
          %233 = sbr.rel (%p231) target = $region44
        $region43: #{tpu_custom_call.1} parent=39 // pred_region
          %s234 = sand.u32 %s96, 1
          %s235 = scalar_lea.sflag [#allocation4], %s234
          %s236 = sand.u32 %s96, 1
          %s237 = smul.addr %s236, 2
          %s238 = scalar_lea.vmem [#allocation5], %s237
          %240 = dma.done %s235, 32
        $region44: #{tpu_custom_call.1} parent=39 // pred_fallthru
          _
      $region40: #{tpu_custom_call.1} parent=5 // pred_fallthru
        _
    $region6: #{tpu_custom_call.1} parent=1 // loop_footer
      %s18 = sadd.s32 1, %s14
    $region7: #{tpu_custom_call.1} parent=1 // loop_footer_branch
      %13 = sbr.rel target = $region3
    $region8: #{tpu_custom_call.1} parent=1 // loop_exit
      _
    %241 = vsyncpa [#allocation3], 1
    %s242 = scalar_lea.sflag [#allocation3], 1
    %243 = vsyncpa %s242, 1
    %244 = vsyncpa [#allocation4], 1
    %s245 = scalar_lea.sflag [#allocation4], 1
    %246 = vsyncpa %s245, 1

</llo_original>
